<compile_context>
chip_gen: v7x
topology: tpu7x:2x2x1
jax: 0.10.0
libtpu: 0.0.40
codegen_flags: <defaults>
</compile_context>

<pallas_src>
import functools

import jax
import jax.numpy as jnp
from jax.experimental import pallas as pl
from jax.experimental.pallas import tpu as pltpu

_MIB = 1024 * 1024


def _round_up(x, m):
    return ((x + m - 1) // m) * m


def _pick_tile(dim, granule, max_tile, min_tile):
    """Pick a tile size (multiple of `granule`, <= max_tile).

    If the dim fits in one max tile, round it up to the granule (single tile,
    minimal padding).  Otherwise search candidates and minimize the padded
    extent round_up(dim, t); candidates whose padding is within ~3% of the
    best are treated as ties and the largest tile wins (keeps tiles big).
    """
    max_tile = max(granule, _round_up(max_tile, granule))
    if dim <= max_tile:
        return max(granule, _round_up(dim, granule))
    lo = max(granule, min(_round_up(min_tile, granule), max_tile))
    cands = list(range(lo, max_tile + 1, granule))
    pads = [_round_up(dim, t) for t in cands]
    best_pad = min(pads)
    thresh = best_pad + best_pad // 32
    return max(t for t, p in zip(cands, pads) if p <= thresh)


def _linear_kernel(x_ref, w_ref, b_ref, o_ref, acc_ref):
    # x_ref: (tm, tk)  w_ref: (tk, tn)  b_ref: (8, tn)  o_ref: (tm, tn)
    # acc_ref: (tm, tn) f32 scratch, persistent across the K grid axis.
    k = pl.program_id(2)

    @pl.when(k == 0)
    def _init():
        # Fold bias into the accumulator init: bias is added exactly once and
        # the epilogue saves a full (tm, tn) VPU add pass.
        acc_ref[...] = jnp.broadcast_to(
            b_ref[0:1, :].astype(jnp.float32), acc_ref.shape
        )

    acc_ref[...] += jnp.dot(
        x_ref[...], w_ref[...], preferred_element_type=jnp.float32
    )

    @pl.when(k == pl.num_programs(2) - 1)
    def _epilogue():
        o_ref[...] = acc_ref[...].astype(o_ref.dtype)


@functools.partial(
    jax.jit, static_argnames=("max_tm", "max_tn", "max_tk", "compute_dtype")
)
def linear_with_hooks_forward(
    x, W, b, *, max_tm=512, max_tn=512, max_tk=2048, compute_dtype=None
):
    """x: [..., D_in]  W: [D_in, D_out]  b: [D_out]  ->  [..., D_out]"""
    d_in, d_out = W.shape
    lead = x.shape[:-1]
    out_dtype = x.dtype
    x2d = x.reshape(-1, d_in)
    M = x2d.shape[0]

    # Optional narrow MXU inputs (keeps f32 accumulation + f32 bias add).
    if compute_dtype is not None:
        x2d = x2d.astype(compute_dtype)
        W = W.astype(compute_dtype)
    in_itemsize = jnp.dtype(x2d.dtype).itemsize
    out_itemsize = jnp.dtype(out_dtype).itemsize

    # --- generation-aware VMEM budget --------------------------------------
    try:
        vmem_cap = int(pltpu.get_tpu_info().vmem_capacity_bytes)
    except Exception:
        vmem_cap = 64 * _MIB  # conservative fallback (v7x-sized)
    # Leave headroom for Mosaic internal scratch / semaphores / metadata:
    # ~48 MiB ceiling on 64 MiB parts (v7x), up to ~100 MiB on 128 MiB parts.
    vmem_ceiling = 48 * _MIB if vmem_cap <= 64 * _MIB else 100 * _MIB
    if vmem_cap > 64 * _MIB:
        # v5e/v6e (128 MiB VMEM): allow taller output tiles for higher
        # arithmetic intensity.
        max_tm = max(max_tm, 1024)

    # --- padding-aware, dtype-aware tile selection --------------------------
    # Sublane granule: 8 for f32, 16 for bf16, 32 for int8/fp8.
    granule_m = max(8, 32 // min(in_itemsize, out_itemsize))
    tm = _pick_tile(M, granule_m, max_tm, 128)
    tn = _pick_tile(d_out, 128, max_tn, 128)
    tk = _pick_tile(d_in, 128, max_tk, 512)

    Mp = _round_up(M, tm)
    Np = _round_up(d_out, tn)
    Kp = _round_up(d_in, tk)

    # v7x megacore: if there is only one output tile, split M so both
    # TensorCores get work (harmless single extra grid step on 1-TC chips).
    if (Mp // tm) * (Np // tn) < 2 and tm > granule_m:
        tm = _pick_tile(M, granule_m, max(granule_m, tm // 2), granule_m)
        Mp = _round_up(M, tm)

    # Zero-padding is exact for the matmul; padded rows/cols are sliced off.
    if (Mp, Kp) != (M, d_in):
        x2d = jnp.pad(x2d, ((0, Mp - M), (0, Kp - d_in)))
    Wp = W if (Kp, Np) == (d_in, d_out) else jnp.pad(
        W, ((0, Kp - d_in), (0, Np - d_out)))
    bp = b if Np == d_out else jnp.pad(b, (0, Np - d_out))
    # Pre-broadcast bias to 8 sublanes so its tile load is not a masked
    # 1-sublane load.
    b2d = jnp.broadcast_to(bp.reshape(1, Np), (8, Np))

    grid = (Mp // tm, Np // tn, Kp // tk)

    # Double-buffered input/output tiles + f32 accumulator, with headroom.
    tile_bytes = (2 * (tm * tk + tk * tn + 8 * tn) * in_itemsize
                  + 2 * tm * tn * out_itemsize
                  + tm * tn * 4)
    vmem_limit = int(min(max(2 * tile_bytes, 32 * _MIB), vmem_ceiling))

    # Truthful traffic estimate: x is re-read once per N tile, W once per M
    # tile; output written once.
    cost = pl.CostEstimate(
        flops=2 * Mp * Kp * Np,
        transcendentals=0,
        bytes_accessed=(Mp * Kp * grid[1] * in_itemsize
                        + Kp * Np * grid[0] * in_itemsize
                        + 8 * Np * jnp.dtype(b2d.dtype).itemsize
                        + Mp * Np * out_itemsize),
    )

    out = pl.pallas_call(
        _linear_kernel,
        out_shape=jax.ShapeDtypeStruct((Mp, Np), out_dtype),
        grid_spec=pltpu.PrefetchScalarGridSpec(
            num_scalar_prefetch=0,
            grid=grid,
            in_specs=[
                pl.BlockSpec((tm, tk), lambda i, j, k: (i, k)),   # x tile
                pl.BlockSpec((tk, tn), lambda i, j, k: (k, j)),   # W tile
                pl.BlockSpec((8, tn), lambda i, j, k: (0, j)),    # bias tile
            ],
            out_specs=pl.BlockSpec((tm, tn), lambda i, j, k: (i, j)),
            scratch_shapes=[pltpu.VMEM((tm, tn), jnp.float32)],
        ),
        compiler_params=pltpu.CompilerParams(
            dimension_semantics=("parallel", "parallel", "arbitrary"),
            vmem_limit_bytes=vmem_limit,
        ),
        cost_estimate=cost,
    )(x2d, Wp, b2d)

    out = out[:M, :d_out]
    return out.reshape(*lead, d_out)


def kaiming_init(key, shape, fan_in, dtype=jnp.float32):
    # deterministic kaiming-normal-like init: N(0, 1) * sqrt(2 / fan_in)
    return (jax.random.normal(key, shape, dtype=jnp.float32)
            * jnp.sqrt(2.0 / fan_in)).astype(dtype)


if __name__ == "__main__":
    key = jax.random.PRNGKey(0)
    k_x, k_w, k_b, k_x2, k_w2, k_b2, k_x3, k_w3, k_b3 = jax.random.split(key, 9)

    # TODO(synk): gradient hooks (update_stats on W/b grads) are backward-pass
    # bookkeeping with no forward compute; not representable in a forward kernel.

    # --- small shape matching the module's toy usage ------------------------
    B, S, D_IN, D_OUT = 2, 8, 32, 32
    x = jax.random.normal(k_x, (B, S, D_IN), dtype=jnp.float32)
    W = kaiming_init(k_w, (D_IN, D_OUT), fan_in=D_IN)
    b = kaiming_init(k_b, (D_OUT,), fan_in=D_IN)

    out = linear_with_hooks_forward(x, W, b)
    jax.block_until_ready(out)
    ref = jnp.matmul(x, W) + b
    assert out.shape == (B, S, D_OUT)
    assert jnp.allclose(out, ref, atol=1e-5, rtol=1e-5), "mismatch vs reference (small)"

    # --- larger shape: padding-free tiles, K accumulation, multi-tile grid ---
    B2, S2, D_IN2, D_OUT2 = 4, 96, 1024, 256   # M=384 -> zero M padding now
    x2 = jax.random.normal(k_x2, (B2, S2, D_IN2), dtype=jnp.float32)
    W2 = kaiming_init(k_w2, (D_IN2, D_OUT2), fan_in=D_IN2)
    b2 = kaiming_init(k_b2, (D_OUT2,), fan_in=D_IN2)

    out2 = linear_with_hooks_forward(x2, W2, b2)
    jax.block_until_ready(out2)
    ref2 = jnp.matmul(x2, W2) + b2
    assert out2.shape == (B2, S2, D_OUT2)
    assert jnp.allclose(out2, ref2, atol=1e-4, rtol=1e-4), "mismatch vs reference (large)"

    # --- bf16 inputs: exercises dtype-aware sublane granule + f32 accumulate -
    B3, S3, D_IN3, D_OUT3 = 2, 24, 256, 384
    x3 = jax.random.normal(k_x3, (B3, S3, D_IN3), dtype=jnp.float32).astype(jnp.bfloat16)
    W3 = kaiming_init(k_w3, (D_IN3, D_OUT3), fan_in=D_IN3, dtype=jnp.bfloat16)
    b3 = kaiming_init(k_b3, (D_OUT3,), fan_in=D_IN3, dtype=jnp.bfloat16)

    out3 = linear_with_hooks_forward(x3, W3, b3)
    jax.block_until_ready(out3)
    ref3 = (jnp.matmul(x3.astype(jnp.float32), W3.astype(jnp.float32))
            + b3.astype(jnp.float32))
    assert out3.shape == (B3, S3, D_OUT3)
    assert jnp.allclose(out3.astype(jnp.float32), ref3, atol=3e-2, rtol=3e-2), \
        "mismatch vs reference (bf16)"

    print("KERNEL_OK")
</pallas_src>

<mosaic_0001>
module attributes {stable_mosaic.version = 11 : i64} {
  func.func @_linear_kernel(%arg0: i32, %arg1: i32, %arg2: i32, %arg3: memref<8x128xf32, #tpu.memory_space<vmem>>, %arg4: memref<128x128xf32, #tpu.memory_space<vmem>>, %arg5: memref<8x128xf32, #tpu.memory_space<vmem>>, %arg6: memref<8x128xf32, #tpu.memory_space<vmem>>, %arg7: memref<8x128xf32, #tpu.memory_space<vmem>>) attributes {dimension_semantics = [#tpu.dimension_semantics<parallel>, #tpu.dimension_semantics<parallel>, #tpu.dimension_semantics<arbitrary>], iteration_bounds = array<i64: 2, 1, 1>, scalar_prefetch = 0 : i64, scratch_operands = 1 : i64, tpu.core_type = #tpu.core_type<tc>, window_params = [{transform_indices = @transform_0, window_bounds = array<i64: 8, 128>}, {transform_indices = @transform_1, window_bounds = array<i64: 128, 128>}, {transform_indices = @transform_2, window_bounds = array<i64: 8, 128>}, {transform_indices = @transform_3, window_bounds = array<i64: 8, 128>}]} {
    %c0_i32 = arith.constant 0 : i32
    %0 = arith.cmpi eq, %arg2, %c0_i32 : i32
    %1 = arith.extui %0 : i1 to i32
    %c0_i32_0 = arith.constant 0 : i32
    %2 = arith.cmpi ne, %1, %c0_i32_0 : i32
    scf.if %2 {
      %c0_10 = arith.constant 0 : index
      %c0_11 = arith.constant 0 : index
      %12 = vector.load %arg5[%c0_10, %c0_11] : memref<8x128xf32, #tpu.memory_space<vmem>>, vector<1x128xf32>
      %13 = vector.shape_cast %12 : vector<1x128xf32> to vector<1x128xf32>
      %14 = vector.broadcast %13 : vector<1x128xf32> to vector<8x128xf32>
      %c0_12 = arith.constant 0 : index
      %c0_13 = arith.constant 0 : index
      %15 = vector.load %arg7[%c0_12, %c0_13] : memref<8x128xf32, #tpu.memory_space<vmem>>, vector<8x128xf32>
      tpu.vector_store %arg7[%c0_12, %c0_13], %14 {strides = array<i32>} : memref<8x128xf32, #tpu.memory_space<vmem>>, vector<8x128xf32>,
    } else {
    }
    %c0 = arith.constant 0 : index
    %c0_1 = arith.constant 0 : index
    %3 = vector.load %arg7[%c0, %c0_1] : memref<8x128xf32, #tpu.memory_space<vmem>>, vector<8x128xf32>
    %c0_2 = arith.constant 0 : index
    %c0_3 = arith.constant 0 : index
    %4 = vector.load %arg3[%c0_2, %c0_3] : memref<8x128xf32, #tpu.memory_space<vmem>>, vector<8x128xf32>
    %c0_4 = arith.constant 0 : index
    %c0_5 = arith.constant 0 : index
    %5 = vector.load %arg4[%c0_4, %c0_5] : memref<128x128xf32, #tpu.memory_space<vmem>>, vector<128x128xf32>
    %cst = arith.constant dense<0.000000e+00> : vector<8x128xf32>
    %6 = tpu.matmul %4, %5, %cst {dimension_numbers = #tpu.dot_dimension_numbers<[1], [0], [0], [1], [0, 0, 1, 1], [], []>} : vector<8x128xf32>, vector<128x128xf32>, vector<8x128xf32> -> vector<8x128xf32>
    %7 = arith.addf %3, %6 : vector<8x128xf32>
    %c0_6 = arith.constant 0 : index
    %c0_7 = arith.constant 0 : index
    %8 = vector.load %arg7[%c0_6, %c0_7] : memref<8x128xf32, #tpu.memory_space<vmem>>, vector<8x128xf32>
    tpu.vector_store %arg7[%c0_6, %c0_7], %7 {strides = array<i32>} : memref<8x128xf32, #tpu.memory_space<vmem>>, vector<8x128xf32>,
    %c0_i32_8 = arith.constant 0 : i32
    %9 = arith.cmpi eq, %arg2, %c0_i32_8 : i32
    %10 = arith.extui %9 : i1 to i32
    %c0_i32_9 = arith.constant 0 : i32
    %11 = arith.cmpi ne, %10, %c0_i32_9 : i32
    scf.if %11 {
      %c0_10 = arith.constant 0 : index
      %c0_11 = arith.constant 0 : index
      %12 = vector.load %arg7[%c0_10, %c0_11] : memref<8x128xf32, #tpu.memory_space<vmem>>, vector<8x128xf32>
      %c0_12 = arith.constant 0 : index
      %c0_13 = arith.constant 0 : index
      %13 = vector.load %arg6[%c0_12, %c0_13] : memref<8x128xf32, #tpu.memory_space<vmem>>, vector<8x128xf32>
      tpu.vector_store %arg6[%c0_12, %c0_13], %12 {strides = array<i32>} : memref<8x128xf32, #tpu.memory_space<vmem>>, vector<8x128xf32>,
    } else {
    }
    return
  }
  func.func @transform_0(%arg0: i32, %arg1: i32, %arg2: i32) -> (i32, i32) {
    %c0_i32 = arith.constant 0 : i32
    return %arg0, %arg2 : i32, i32
  }
  func.func @transform_1(%arg0: i32, %arg1: i32, %arg2: i32) -> (i32, i32) {
    %c0_i32 = arith.constant 0 : i32
    return %arg2, %arg1 : i32, i32
  }
  func.func @transform_2(%arg0: i32, %arg1: i32, %arg2: i32) -> (i32, i32) {
    %c0_i32 = arith.constant 0 : i32
    %c0_i32_0 = arith.constant 0 : i32
    return %c0_i32, %arg1 : i32, i32
  }
  func.func @transform_3(%arg0: i32, %arg1: i32, %arg2: i32) -> (i32, i32) {
    %c0_i32 = arith.constant 0 : i32
    return %arg0, %arg1 : i32, i32
  }
}

</mosaic_0001>

<llo_original>
// kernel: linear_with_hooks_forward.1
$region0: #{linear_with_hooks_forward.1}
  #allocation0 [shape = 'u32[]', space=smem, size = 0x4, offset = 0x4, fixed_abs, tag = 'smem constant byte address 0x4 - core index']
  #allocation1 [shape = 'u32[144,128]{1,0:T(1,128)}', space=vmem, size = 0x12000, scoped, tag = 'internal scratch']
  #allocation2 [shape = 'f32[8,128]{1,0:T(8,128)}', space=vmem, size = 0x1000, scoped, tag = 'scratch operand']
  %s0 = inlined_call_operand.vmem [shape: f32[16,128], index: 0, kind: input, shape index: {}]
  %s1 = inlined_call_operand.vmem [shape: f32[128,128], index: 1, kind: input, shape index: {}]
  %s2 = inlined_call_operand.vmem [shape: f32[8,128], index: 2, kind: input, shape index: {}]
  %s3 = inlined_call_operand.vmem [shape: f32[16,128], index: 3, kind: output, shape index: {}]
  %s4 = sld [smem:[#allocation0]]
  $region53: #{linear_with_hooks_forward.1} parent=0
    _
  %s6 = ssub.s32 1, %s4
  %s7 = scalar_select 0, %s6, %s4
  loop: start=0, step=1, limit=4
  $region2: #{linear_with_hooks_forward.1} parent=0 // loop_pre_header
    _
  $region3: #{linear_with_hooks_forward.1} parent=0 // loop_header
    %s9 = sphi 0, %s13
    %p10 = scmp.ge.s32.totalorder %s9, 4
    %s16 = sphi 0, %s35
    %s17 = sphi 0, %s31
    %s18 = sphi 0, %s27
    %s19 = sphi 0, %s16
    %s20 = sphi 0, %s17
    %s21 = sphi 0, %s18
    %s22 = sphi 0, %s19
    %s23 = sphi 0, %s20
    %s24 = sphi 0, %s21
    %s40 = sphi 0, %s42
    %s43 = sphi 0, %s40
    %s44 = sphi 0, %s43
    %s60 = sphi 0, %s44
    %s68 = sphi 0, %s70
    %s71 = sphi 0, %s68
    %s72 = sphi 0, %s71
    %s88 = sphi 0, %s72
    %s94 = sphi 0, %s96
    %s97 = sphi 0, %s94
    %s98 = sphi 0, %s97
    %s114 = sphi 0, %s98
    %s122 = sphi 0, %s124
    %s125 = sphi 0, %s122
    %s126 = sphi 0, %s125
    %s142 = sphi 0, %s126
  $region4: #{linear_with_hooks_forward.1} parent=0 // loop_header_branch
    %12 = sbr.rel (%p10) target = $region8
  $region5: #{linear_with_hooks_forward.1} parent=0 // loop_body
    %s14 = ssub.s32 %s9, 1
    %s15 = ssub.s32 %s9, 2
    %s25 = sadd.s32 1, %s18
    %p26 = scmp.ge.s32.totalorder %s25, 1
    %s27 = scalar_select %p26, 0, %s25
    %s28 = sadd.s32 1, %s17
    %s29 = scalar_select %p26, %s28, %s17
    %p30 = scmp.ge.s32.totalorder %s29, 1
    %s31 = scalar_select %p30, 0, %s29
    %s32 = sadd.s32 1, %s16
    %s33 = scalar_select %p30, %s32, %s16
    %p34 = scmp.ge.s32.totalorder %s33, 2
    %s35 = scalar_select %p34, 0, %s33
    %s36 = ssub.s32 %s16, %s35
    %s37 = ssub.s32 %s18, %s27
    %s38 = sor.u32 %s36, %s37
    %p39 = scmp.eq.s32.totalorder %s38, 0
    %s41 = sadd.s32 %s40, 1
    %s42 = scalar_select %p39, %s40, %s41
    %p45 = pneg %p39
    %p46 = scmp.eq.s32.totalorder %s9, 1
    %p47 = por %p45, %p46
    %p48 = scmp.ne.s32.totalorder %s40, %s43
    %p49 = scmp.eq.s32.totalorder %s9, 0
    %p50 = por %p48, %p49
    %p51 = scmp.ne.s32.totalorder %s40, %s43
    %p52 = scmp.eq.s32.totalorder %s14, 1
    %p53 = por %p51, %p52
    %p54 = scmp.ne.s32.totalorder %s43, %s44
    %p55 = scmp.eq.s32.totalorder %s14, 0
    %p56 = por %p54, %p55
    %p57 = scmp.ne.s32.totalorder %s43, %s44
    %p58 = scmp.eq.s32.totalorder %s15, 1
    %p59 = por %p57, %p58
    %p61 = scmp.ne.s32.totalorder %s44, %s60
    %p62 = scmp.eq.s32.totalorder %s15, 0
    %p63 = por %p61, %p62
    %s64 = ssub.s32 %s18, %s27
    %s65 = ssub.s32 %s17, %s31
    %s66 = sor.u32 %s64, %s65
    %p67 = scmp.eq.s32.totalorder %s66, 0
    %s69 = sadd.s32 %s68, 1
    %s70 = scalar_select %p67, %s68, %s69
    %p73 = pneg %p67
    %p74 = scmp.eq.s32.totalorder %s9, 1
    %p75 = por %p73, %p74
    %p76 = scmp.ne.s32.totalorder %s68, %s71
    %p77 = scmp.eq.s32.totalorder %s9, 0
    %p78 = por %p76, %p77
    %p79 = scmp.ne.s32.totalorder %s68, %s71
    %p80 = scmp.eq.s32.totalorder %s14, 1
    %p81 = por %p79, %p80
    %p82 = scmp.ne.s32.totalorder %s71, %s72
    %p83 = scmp.eq.s32.totalorder %s14, 0
    %p84 = por %p82, %p83
    %p85 = scmp.ne.s32.totalorder %s71, %s72
    %p86 = scmp.eq.s32.totalorder %s15, 1
    %p87 = por %p85, %p86
    %p89 = scmp.ne.s32.totalorder %s72, %s88
    %p90 = scmp.eq.s32.totalorder %s15, 0
    %p91 = por %p89, %p90
    %s92 = ssub.s32 %s17, %s31
    %p93 = scmp.eq.s32.totalorder %s92, 0
    %s95 = sadd.s32 %s94, 1
    %s96 = scalar_select %p93, %s94, %s95
    %p99 = pneg %p93
    %p100 = scmp.eq.s32.totalorder %s9, 1
    %p101 = por %p99, %p100
    %p102 = scmp.ne.s32.totalorder %s94, %s97
    %p103 = scmp.eq.s32.totalorder %s9, 0
    %p104 = por %p102, %p103
    %p105 = scmp.ne.s32.totalorder %s94, %s97
    %p106 = scmp.eq.s32.totalorder %s14, 1
    %p107 = por %p105, %p106
    %p108 = scmp.ne.s32.totalorder %s97, %s98
    %p109 = scmp.eq.s32.totalorder %s14, 0
    %p110 = por %p108, %p109
    %p111 = scmp.ne.s32.totalorder %s97, %s98
    %p112 = scmp.eq.s32.totalorder %s15, 1
    %p113 = por %p111, %p112
    %p115 = scmp.ne.s32.totalorder %s98, %s114
    %p116 = scmp.eq.s32.totalorder %s15, 0
    %p117 = por %p115, %p116
    %s118 = ssub.s32 %s16, %s35
    %s119 = ssub.s32 %s17, %s31
    %s120 = sor.u32 %s118, %s119
    %p121 = scmp.eq.s32.totalorder %s120, 0
    %s123 = sadd.s32 %s122, 1
    %s124 = scalar_select %p121, %s122, %s123
    %p127 = pneg %p121
    %p128 = scmp.eq.s32.totalorder %s9, 1
    %p129 = por %p127, %p128
    %p130 = scmp.ne.s32.totalorder %s122, %s125
    %p131 = scmp.eq.s32.totalorder %s9, 0
    %p132 = por %p130, %p131
    %p133 = scmp.ne.s32.totalorder %s122, %s125
    %p134 = scmp.eq.s32.totalorder %s14, 1
    %p135 = por %p133, %p134
    %p136 = scmp.ne.s32.totalorder %s125, %s126
    %p137 = scmp.eq.s32.totalorder %s14, 0
    %p138 = por %p136, %p137
    %p139 = scmp.ne.s32.totalorder %s125, %s126
    %p140 = scmp.eq.s32.totalorder %s15, 1
    %p141 = por %p139, %p140
    %p143 = scmp.ne.s32.totalorder %s126, %s142
    %p144 = scmp.eq.s32.totalorder %s15, 0
    %p145 = por %p143, %p144
    %p146 = scmp.le.s32.totalorder 1, %s9
    %p147 = scmp.lt.s32.totalorder %s9, 3
    %p148 = pnand %p146, %p147
    %p149 = pneg %p148
    // Predicated region
    $region9: #{linear_with_hooks_forward.1} parent=5 // pred_check
      _
    $region10: #{linear_with_hooks_forward.1} parent=5 // pred_check_branch
      %151 = sbr.rel (%p148) target = $region12
    $region11: #{linear_with_hooks_forward.1} parent=5 // pred_region
      %s152 = ssub.s32 %s9, 1
      // Predicated region
      $region13: #{linear_with_hooks_forward.1} parent=11 // pred_check
        %p153 = pneg %p84
      $region14: #{linear_with_hooks_forward.1} parent=11 // pred_check_branch
        %155 = sbr.rel (%p153) target = $region16
      $region15: #{linear_with_hooks_forward.1} parent=11 // pred_region
        %s156 = smul.u32 16, %s21
        %p157 = scmp.lt.s32.totalorder %s156, 15
        %s158 = scalar_select %p157, %s156, 15
        %p159 = scmp.lt.s32.totalorder %s20, 0
        %s160 = scalar_select %p159, %s20, 0
        %s161 = sadd.s32 %s160, %s158
        %s162 = smul.addr %s161, 8
        %s163 = scalar_lea.vmem %s1, %s162
        %s164 = smul.u32 16, %s21
      $region16: #{linear_with_hooks_forward.1} parent=11 // pred_fallthru
        _
      // Predicated region
      $region17: #{linear_with_hooks_forward.1} parent=11 // pred_check
        %p165 = pneg %p110
      $region18: #{linear_with_hooks_forward.1} parent=11 // pred_check_branch
        %167 = sbr.rel (%p165) target = $region20
      $region19: #{linear_with_hooks_forward.1} parent=11 // pred_region
        %p168 = scmp.lt.s32.totalorder %s20, 0
        %s169 = scalar_select %p168, %s20, 0
        %s170 = smul.addr %s169, 8
        %s171 = scalar_lea.vmem %s2, %s170
      $region20: #{linear_with_hooks_forward.1} parent=11 // pred_fallthru
        _
    $region12: #{linear_with_hooks_forward.1} parent=5 // pred_fallthru
      _
    %p172 = scmp.lt.s32.totalorder %s9, 2
    // Predicated region
    $region21: #{linear_with_hooks_forward.1} parent=5 // pred_check
      %p173 = pneg %p172
    $region22: #{linear_with_hooks_forward.1} parent=5 // pred_check_branch
      %175 = sbr.rel (%p173) target = $region24
    $region23: #{linear_with_hooks_forward.1} parent=5 // pred_region
      // Predicated region
      $region25: #{linear_with_hooks_forward.1} parent=23 // pred_check
        %p176 = pneg %p50
      $region26: #{linear_with_hooks_forward.1} parent=23 // pred_check_branch
        %178 = sbr.rel (%p176) target = $region28
      $region27: #{linear_with_hooks_forward.1} parent=23 // pred_region
        %p179 = scmp.lt.s32.totalorder %s16, 1
        %s180 = scalar_select %p179, %s16, 1
        %p181 = scmp.lt.s32.totalorder %s18, 0
        %s182 = scalar_select %p181, %s18, 0
        %s183 = sadd.s32 %s182, %s180
        %s184 = smul.addr %s183, 8
        %s185 = scalar_lea.vmem %s0, %s184
      $region28: #{linear_with_hooks_forward.1} parent=23 // pred_fallthru
        _
    $region24: #{linear_with_hooks_forward.1} parent=5 // pred_fallthru
      _
    %p186 = scmp.le.s32.totalorder 1, %s9
    %p187 = scmp.lt.s32.totalorder %s9, 3
    %p188 = pnand %p186, %p187
    %p189 = pneg %p188
    // Predicated region
    $region29: #{linear_with_hooks_forward.1} parent=5 // pred_check
      _
    $region30: #{linear_with_hooks_forward.1} parent=5 // pred_check_branch
      %191 = sbr.rel (%p188) target = $region32
    $region31: #{linear_with_hooks_forward.1} parent=5 // pred_region
      %s192 = ssub.s32 %s9, 1
      %p193 = scmp.lt.s32.totalorder %s19, 1
      %s194 = scalar_select %p193, %s19, 1
      %p195 = scmp.lt.s32.totalorder %s21, 0
      %s196 = scalar_select %p195, %s21, 0
      %s197 = sadd.s32 %s196, %s194
      %s198 = smul.addr %s197, 8
      %s199 = scalar_lea.vmem %s0, %s198
      %p200 = pneg %p56
      %p201 = pneg %p53
      %s202 = smul.u32 16, %s21
      %p203 = scmp.lt.s32.totalorder %s202, 15
      %s204 = scalar_select %p203, %s202, 15
      %p205 = scmp.lt.s32.totalorder %s20, 0
      %s206 = scalar_select %p205, %s20, 0
      %s207 = sadd.s32 %s206, %s204
      %s208 = smul.addr %s207, 8
      %s209 = scalar_lea.vmem %s1, %s208
      %p210 = pneg %p84
      %p211 = pneg %p81
      %p212 = scmp.lt.s32.totalorder %s20, 0
      %s213 = scalar_select %p212, %s20, 0
      %s214 = smul.addr %s213, 8
      %s215 = scalar_lea.vmem %s2, %s214
      %p216 = pneg %p110
      %p217 = pneg %p107
      %p218 = pneg %p138
      %p219 = pneg %p135
      %p220 = scmp.lt.s32.totalorder %s19, 1
      %s221 = scalar_select %p220, %s19, 1
      %p222 = scmp.lt.s32.totalorder %s20, 0
      %s223 = scalar_select %p222, %s20, 0
      %s224 = sadd.s32 %s223, %s221
      %s225 = smul.addr %s224, 8
      %s226 = scalar_lea.vmem %s3, %s225
      %p227 = scmp.lt.s32.totalorder %s19, 1
      %s228 = scalar_select %p227, %s19, 1
      %p229 = scmp.lt.s32.totalorder %s21, 0
      %s230 = scalar_select %p229, %s21, 0
      %s231 = sadd.s32 %s230, %s228
      %s232 = smul.addr %s231, 8
      %s233 = scalar_lea.vmem %s0, %s232
      %s234 = smul.u32 16, %s21
      %p235 = scmp.lt.s32.totalorder %s234, 15
      %s236 = scalar_select %p235, %s234, 15
      %p237 = scmp.lt.s32.totalorder %s20, 0
      %s238 = scalar_select %p237, %s20, 0
      %s239 = sadd.s32 %s238, %s236
      %s240 = smul.addr %s239, 8
      %s241 = scalar_lea.vmem %s1, %s240
      %s242 = smul.u32 16, %s21
      %p243 = scmp.lt.s32.totalorder %s20, 0
      %s244 = scalar_select %p243, %s20, 0
      %s245 = smul.addr %s244, 8
      %s246 = scalar_lea.vmem %s2, %s245
      %p247 = scmp.lt.s32.totalorder %s19, 1
      %s248 = scalar_select %p247, %s19, 1
      %p249 = scmp.lt.s32.totalorder %s20, 0
      %s250 = scalar_select %p249, %s20, 0
      %s251 = sadd.s32 %s250, %s248
      %s252 = smul.addr %s251, 8
      %s253 = scalar_lea.vmem %s3, %s252
      %p254 = scmp.eq.s32.totalorder %s21, 0
      // Predicated region
      $region33: #{linear_with_hooks_forward.1} parent=31 // pred_check
        %p255 = pneg %p254
      $region34: #{linear_with_hooks_forward.1} parent=31 // pred_check_branch
        %257 = sbr.rel (%p255) target = $region36
      $region35: #{linear_with_hooks_forward.1} parent=31 // pred_region
        %v258 = vld [vmem:[%s246] sm:$0x1]
        %v259 = vlaneseq
        %v260 = vshrl.u32 %v259, 7
        %v261 = vsub.s32 0, %v260
        %v262 = vrot.slane %v258, %v261
        %263 = vst [vmem:[#allocation2] sm:$0xff] %v262
      $region36: #{linear_with_hooks_forward.1} parent=31 // pred_fallthru
        _
      %v264 = vld [vmem:[#allocation2] sm:$0xff]
      %v265 = vld [vmem:[%s233] sm:$0xff]
      %v266 = vld [vmem:[%s241] sm:$0xff]
      %v267 = vld [vmem:[%s241 + $0x8] sm:$0xff]
      %v268 = vld [vmem:[%s241 + $0x10] sm:$0xff]
      %v269 = vld [vmem:[%s241 + $0x18] sm:$0xff]
      %v270 = vld [vmem:[%s241 + $0x20] sm:$0xff]
      %v271 = vld [vmem:[%s241 + $0x28] sm:$0xff]
      %v272 = vld [vmem:[%s241 + $0x30] sm:$0xff]
      %v273 = vld [vmem:[%s241 + $0x38] sm:$0xff]
      %v274 = vld [vmem:[%s241 + $0x40] sm:$0xff]
      %v275 = vld [vmem:[%s241 + $0x48] sm:$0xff]
      %v276 = vld [vmem:[%s241 + $0x50] sm:$0xff]
      %v277 = vld [vmem:[%s241 + $0x58] sm:$0xff]
      %v278 = vld [vmem:[%s241 + $0x60] sm:$0xff]
      %v279 = vld [vmem:[%s241 + $0x68] sm:$0xff]
      %v280 = vld [vmem:[%s241 + $0x70] sm:$0xff]
      %v281 = vld [vmem:[%s241 + $0x78] sm:$0xff]
      %282 = vmatprep.subr.mxu0 0.0
      %283 = vmatpush1.msra.mxu0 %v266
      %284 = vmatprep.subr.mxu0 0.0
      %285 = vmatpush1.msra.mxu0 %v267
      %286 = vmatprep.subr.mxu0 0.0
      %287 = vmatpush1.msra.mxu0 %v268
      %288 = vmatprep.subr.mxu0 0.0
      %289 = vmatpush1.msra.mxu0 %v269
      %290 = vmatprep.subr.mxu0 0.0
      %291 = vmatpush1.msra.mxu0 %v270
      %292 = vmatprep.subr.mxu0 0.0
      %293 = vmatpush1.msra.mxu0 %v271
      %294 = vmatprep.subr.mxu0 0.0
      %295 = vmatpush1.msra.mxu0 %v272
      %296 = vmatprep.subr.mxu0 0.0
      %297 = vmatpush1.msra.mxu0 %v273
      %298 = vmatprep.subr.mxu0 0.0
      %299 = vmatpush1.msra.mxu0 %v274
      %300 = vmatprep.subr.mxu0 0.0
      %301 = vmatpush1.msra.mxu0 %v275
      %302 = vmatprep.subr.mxu0 0.0
      %303 = vmatpush1.msra.mxu0 %v276
      %304 = vmatprep.subr.mxu0 0.0
      %305 = vmatpush1.msra.mxu0 %v277
      %306 = vmatprep.subr.mxu0 0.0
      %307 = vmatpush1.msra.mxu0 %v278
      %308 = vmatprep.subr.mxu0 0.0
      %309 = vmatpush1.msra.mxu0 %v279
      %310 = vmatprep.subr.mxu0 0.0
      %311 = vmatpush1.msra.mxu0 %v280
      %312 = vmatprep.subr.mxu0 0.0
      %313 = vmatpush1.msra.mxu0 %v281
      %314 = vmatprep.subr.mxu0 0.0
      %315 = vmatpush1.msra.mxu0 0.0
      %316 = vmatprep.subr.mxu0 0.0
      %317 = vmatpush1.msra.mxu0 0.0
      %318 = vmatprep.subr.mxu0 0.0
      %319 = vmatpush1.msra.mxu0 0.0
      %320 = vmatprep.subr.mxu0 0.0
      %321 = vmatpush1.msra.mxu0 0.0
      %322 = vmatprep.subr.mxu0 0.0
      %323 = vmatpush1.msra.mxu0 0.0
      %324 = vmatprep.subr.mxu0 0.0
      %325 = vmatpush1.msra.mxu0 0.0
      %326 = vmatprep.subr.mxu0 0.0
      %327 = vmatpush1.msra.mxu0 0.0
      %328 = vmatprep.subr.mxu0 0.0
      %329 = vmatpush1.msra.mxu0 0.0
      %330 = vmatprep.subr.mxu0 0.0
      %331 = vmatpush1.msra.mxu0 0.0
      %332 = vmatprep.subr.mxu0 0.0
      %333 = vmatpush1.msra.mxu0 0.0
      %334 = vmatprep.subr.mxu0 0.0
      %335 = vmatpush1.msra.mxu0 0.0
      %336 = vmatprep.subr.mxu0 0.0
      %337 = vmatpush1.msra.mxu0 0.0
      %338 = vmatprep.subr.mxu0 0.0
      %339 = vmatpush1.msra.mxu0 0.0
      %340 = vmatprep.subr.mxu0 0.0
      %341 = vmatpush1.msra.mxu0 0.0
      %342 = vmatprep.subr.mxu0 0.0
      %343 = vmatpush1.msra.mxu0 0.0
      %344 = vmatprep.subr.mxu0 0.0
      %345 = vmatpush1.msra.mxu0 0.0
      %346 = vmatprep.mubr.f32.mxu0 0.0
      %347 = vmatmul.mubr.f32.gmra.mrb[0].mxu0 %v265
      %v348 = vpop.f32.mrb[0].mxu0
      %v349 = vadd.f32 0.0, %v348
      %v350 = vpop.f32.mrb[0].mxu0
      %351 = vdwg.mxu0
      %v352 = vadd.f32 %v264, %v349
      %353 = vst [vmem:[#allocation2] sm:$0xff] %v352
      // Predicated region
      $region37: #{linear_with_hooks_forward.1} parent=31 // pred_check
        %p354 = pneg %p254
      $region38: #{linear_with_hooks_forward.1} parent=31 // pred_check_branch
        %356 = sbr.rel (%p354) target = $region40
      $region39: #{linear_with_hooks_forward.1} parent=31 // pred_region
        %v357 = vld [vmem:[#allocation2] sm:$0xff]
        %358 = vst [vmem:[%s253] sm:$0xff] %v357
      $region40: #{linear_with_hooks_forward.1} parent=31 // pred_fallthru
        _
      %p359 = scmp.lt.s32.totalorder %s19, 1
      %s360 = scalar_select %p359, %s19, 1
      %p361 = scmp.lt.s32.totalorder %s20, 0
      %s362 = scalar_select %p361, %s20, 0
      %s363 = sadd.s32 %s362, %s360
      %s364 = smul.addr %s363, 8
      %s365 = scalar_lea.vmem %s3, %s364
      // Predicated region
      $region41: #{linear_with_hooks_forward.1} parent=31 // pred_check
        %p366 = pneg %p135
      $region42: #{linear_with_hooks_forward.1} parent=31 // pred_check_branch
        %368 = sbr.rel (%p366) target = $region44
      $region43: #{linear_with_hooks_forward.1} parent=31 // pred_region
        _
      $region44: #{linear_with_hooks_forward.1} parent=31 // pred_fallthru
        _
    $region32: #{linear_with_hooks_forward.1} parent=5 // pred_fallthru
      _
    %p369 = scmp.le.s32.totalorder 2, %s9
    // Predicated region
    $region45: #{linear_with_hooks_forward.1} parent=5 // pred_check
      %p370 = pneg %p369
    $region46: #{linear_with_hooks_forward.1} parent=5 // pred_check_branch
      %372 = sbr.rel (%p370) target = $region48
    $region47: #{linear_with_hooks_forward.1} parent=5 // pred_region
      %s373 = ssub.s32 %s9, 2
      // Predicated region
      $region49: #{linear_with_hooks_forward.1} parent=47 // pred_check
        %p374 = pneg %p141
      $region50: #{linear_with_hooks_forward.1} parent=47 // pred_check_branch
        %376 = sbr.rel (%p374) target = $region52
      $region51: #{linear_with_hooks_forward.1} parent=47 // pred_region
        %p377 = scmp.lt.s32.totalorder %s22, 1
        %s378 = scalar_select %p377, %s22, 1
        %p379 = scmp.lt.s32.totalorder %s23, 0
        %s380 = scalar_select %p379, %s23, 0
        %s381 = sadd.s32 %s380, %s378
        %s382 = smul.addr %s381, 8
        %s383 = scalar_lea.vmem %s3, %s382
      $region52: #{linear_with_hooks_forward.1} parent=47 // pred_fallthru
        _
    $region48: #{linear_with_hooks_forward.1} parent=5 // pred_fallthru
      _
  $region6: #{linear_with_hooks_forward.1} parent=0 // loop_footer
    %s13 = sadd.s32 1, %s9
  $region7: #{linear_with_hooks_forward.1} parent=0 // loop_footer_branch
    %8 = sbr.rel target = $region3
  $region8: #{linear_with_hooks_forward.1} parent=0 // loop_exit
    _

</llo_original>
